<compile_context>
chip_gen: v5e
topology: v5e:2x2
jax: 0.10.0
libtpu: 0.0.40
codegen_flags: <defaults>
</compile_context>

<pallas_src>
import functools

import jax
import jax.numpy as jnp
from jax.experimental import pallas as pl
from jax.experimental.pallas import tpu as pltpu

LANE = 128
SUBLANE = 8


def _round_up(x, m):
    return ((x + m - 1) // m) * m


def _vmem_capacity_bytes():
    # Generation-aware VMEM capacity (128 MiB on v5e/v6e, 64 MiB per TC on v7x).
    try:
        return int(pltpu.get_tpu_info().vmem_capacity_bytes)
    except Exception:
        return 64 << 20  # conservative default (v7x per-TensorCore)


def _const_spec(shape):
    # VMEM-resident operand: constant index_map, single-buffered (double-buffering a
    # block whose index never changes only wastes VMEM -> halves resident weights).
    index_map = lambda i: (0,) * len(shape)
    try:
        return pl.BlockSpec(shape, index_map, pipeline_mode=pl.Buffered(1))
    except TypeError:  # older jax without the pipeline_mode kwarg
        return pl.BlockSpec(shape, index_map)


# ----------------------------------------------------------------------------- kernels
def _mlp_fused_kernel(x_ref, w1_ref, b1_ref, w2_ref, b2_ref, w3_ref, b3_ref, o_ref):
    # Cast the streamed activation tile to the MXU dtype in-kernel (no wrapper copy).
    x = x_ref[...].astype(w1_ref.dtype)
    # Layer 1: MXU matmul (bf16 in, f32 accumulate), bias + ReLU epilogue on the VPU.
    h = jnp.dot(x, w1_ref[...], preferred_element_type=jnp.float32)
    h = jnp.maximum(h + b1_ref[...], 0.0).astype(w2_ref.dtype)
    # Layer 2.
    h = jnp.dot(h, w2_ref[...], preferred_element_type=jnp.float32)
    h = jnp.maximum(h + b2_ref[...], 0.0).astype(w3_ref.dtype)
    # Output layer (no activation): lane-dense padded store (out dim padded to 128).
    out = jnp.dot(h, w3_ref[...], preferred_element_type=jnp.float32)
    o_ref[...] = (out + b3_ref[...]).astype(o_ref.dtype)


def _linear_kernel(x_ref, w_ref, b_ref, o_ref, *, relu):
    x = x_ref[...].astype(w_ref.dtype)
    y = jnp.dot(x, w_ref[...], preferred_element_type=jnp.float32) + b_ref[...]
    if relu:
        y = jnp.maximum(y, 0.0)
    o_ref[...] = y.astype(o_ref.dtype)


# ----------------------------------------------------------------------------- params
def init_mlp_params(key, input_dim, hidden_dim, output_dim, dtype=jnp.float32):
    # Deterministic init mimicking PyTorch nn.Linear default (uniform +- 1/sqrt(fan_in)).
    ks = jax.random.split(key, 6)

    def linear(kw, kb, fan_in, fan_out):
        bound = 1.0 / jnp.sqrt(fan_in)
        w = jax.random.uniform(kw, (fan_in, fan_out), dtype, -bound, bound)
        b = jax.random.uniform(kb, (1, fan_out), dtype, -bound, bound)
        return w, b

    w1, b1 = linear(ks[0], ks[1], input_dim, hidden_dim)
    w2, b2 = linear(ks[2], ks[3], hidden_dim, hidden_dim)
    w3, b3 = linear(ks[4], ks[5], hidden_dim, output_dim)
    return (w1, b1, w2, b2, w3, b3)


def prepare_params(params, *, compute_dtype=jnp.bfloat16, lane=LANE):
    """One-time (outside the per-call path) lane padding + bf16 cast of the weights.

    The hidden/output (N) dims are padded to multiples of 128 so every matmul and
    the output store are lane-dense; x's feature dim is NOT padded (w1 keeps K =
    input_dim, so x can be fed to the kernel untouched).
    """
    w1, b1, w2, b2, w3, b3 = params
    in_dim, hid = w1.shape
    out_dim = w3.shape[1]
    hid_p = _round_up(hid, lane)
    out_p = _round_up(out_dim, lane)

    def pad2(a, rows, cols, dtype):
        buf = jnp.zeros((rows, cols), dtype)
        return buf.at[: a.shape[0], : a.shape[1]].set(a.astype(dtype))

    padded = (
        pad2(w1, in_dim, hid_p, compute_dtype),
        pad2(b1, 1, hid_p, jnp.float32),
        pad2(w2, hid_p, hid_p, compute_dtype),
        pad2(b2, 1, hid_p, jnp.float32),
        pad2(w3, hid_p, out_p, compute_dtype),
        pad2(b3, 1, out_p, jnp.float32),
    )
    return padded, out_dim


# ----------------------------------------------------------------------------- forward
def _linear_call(x, w, b, *, relu, out_dtype, tile_b, vmem_budget):
    B, in_dim = x.shape
    out_p = w.shape[1]
    x_sz = jnp.dtype(x.dtype).itemsize
    w_sz = jnp.dtype(w.dtype).itemsize
    o_sz = jnp.dtype(out_dtype).itemsize
    resident = in_dim * out_p * w_sz + out_p * 4
    act = 2 * tile_b * in_dim * x_sz + 2 * tile_b * out_p * o_sz + 2 * tile_b * out_p * 4
    vmem_limit = int(min(vmem_budget, max(resident + 2 * act, 16 << 20)))
    return pl.pallas_call(
        functools.partial(_linear_kernel, relu=relu),
        out_shape=jax.ShapeDtypeStruct((B, out_p), out_dtype),
        grid=(pl.cdiv(B, tile_b),),
        in_specs=[
            pl.BlockSpec((tile_b, in_dim), lambda i: (i, 0)),  # streamed activations
            _const_spec(w.shape),
            _const_spec(b.shape),
        ],
        out_specs=pl.BlockSpec((tile_b, out_p), lambda i: (i, 0)),
        compiler_params=pltpu.CompilerParams(
            dimension_semantics=("parallel",),
            vmem_limit_bytes=vmem_limit,
        ),
        cost_estimate=pl.CostEstimate(
            flops=2 * B * in_dim * out_p,
            transcendentals=0,
            bytes_accessed=int(B * in_dim * x_sz + resident + B * out_p * o_sz),
        ),
    )(x, w, b)


def mlp_forward(x, padded_params, out_dim, *, tile_b=None):
    """x: (B, input_dim) at its native dtype; padded_params from prepare_params()."""
    w1, b1, w2, b2, w3, b3 = padded_params
    B, in_dim = x.shape
    assert w1.shape[0] == in_dim
    hid_p = w1.shape[1]
    out_p = w3.shape[1]
    x_sz = jnp.dtype(x.dtype).itemsize
    w_sz = jnp.dtype(w1.dtype).itemsize

    vmem_cap = _vmem_capacity_bytes()
    vmem_budget = int(0.75 * vmem_cap)

    # Resident (single-buffered) weights + biases.
    resident_w_bytes = (
        (in_dim * hid_p + hid_p * hid_p + hid_p * out_p) * w_sz + (2 * hid_p + out_p) * 4
    )

    # ---- batch tile selection (multiple of 8 sublanes; generation/VMEM aware) ----
    if tile_b is None:
        cap = 1024 if vmem_cap >= (96 << 20) else 512  # v5e/v6e vs v7x
        if B <= SUBLANE:
            tile_b = B  # full-extent sublane dim is legal for tiny batches
        else:
            tile_b = min(_round_up(B, SUBLANE), cap)
            if B >= 2 * SUBLANE:
                # keep >= 2 grid steps so the "parallel" batch axis can be split
                # across the two TensorCores on v7x (megacore).
                tile_b = min(tile_b, _round_up(pl.cdiv(B, 2), SUBLANE))

    def act_vmem(tb):
        # double-buffered streamed x/out tiles + in-flight f32/bf16 intermediates
        return 2 * tb * in_dim * x_sz + 2 * tb * out_p * x_sz + 4 * tb * hid_p * 4

    while tile_b > SUBLANE and act_vmem(tile_b) > vmem_budget // 2:
        tile_b = max(SUBLANE, _round_up(tile_b // 2, SUBLANE))

    fused_ok = resident_w_bytes + act_vmem(tile_b) <= vmem_budget

    if fused_ok:
        vmem_limit = int(min(vmem_budget, max(resident_w_bytes + 2 * act_vmem(tile_b), 16 << 20)))
        flops = 2 * B * (in_dim * hid_p + hid_p * hid_p + hid_p * out_p)
        bytes_accessed = int(B * (in_dim + out_p) * x_sz + resident_w_bytes)
        out_padded = pl.pallas_call(
            _mlp_fused_kernel,
            out_shape=jax.ShapeDtypeStruct((B, out_p), x.dtype),
            grid=(pl.cdiv(B, tile_b),),
            in_specs=[
                pl.BlockSpec((tile_b, in_dim), lambda i: (i, 0)),  # streamed activations
                _const_spec(w1.shape), _const_spec(b1.shape),
                _const_spec(w2.shape), _const_spec(b2.shape),
                _const_spec(w3.shape), _const_spec(b3.shape),
            ],
            out_specs=pl.BlockSpec((tile_b, out_p), lambda i: (i, 0)),
            compiler_params=pltpu.CompilerParams(
                dimension_semantics=("parallel",),
                vmem_limit_bytes=vmem_limit,
            ),
            cost_estimate=pl.CostEstimate(
                flops=flops, transcendentals=0, bytes_accessed=bytes_accessed
            ),
        )(x, w1, b1, w2, b2, w3, b3)
        return out_padded[:, :out_dim]

    # Fallback (e.g. v7x 64 MiB VMEM with large hidden dims): run the three layers as
    # separate pallas_calls so only one weight matrix is VMEM-resident at a time.
    # Intermediate activations stay bf16 to halve their HBM round-trip.
    # TODO(synk): add hidden-dim (K/N) tiling with an f32 accumulator for the case
    # where even a single hid_p x hid_p weight exceeds the per-core VMEM budget.
    h = _linear_call(x, w1, b1, relu=True, out_dtype=w1.dtype, tile_b=tile_b, vmem_budget=vmem_budget)
    h = _linear_call(h, w2, b2, relu=True, out_dtype=w2.dtype, tile_b=tile_b, vmem_budget=vmem_budget)
    y = _linear_call(h, w3, b3, relu=False, out_dtype=x.dtype, tile_b=tile_b, vmem_budget=vmem_budget)
    return y[:, :out_dim]


# ----------------------------------------------------------------------------- test
def _reference_f32(x, params):
    w1, b1, w2, b2, w3, b3 = params
    h = jnp.maximum(x @ w1 + b1, 0.0)
    h = jnp.maximum(h @ w2 + b2, 0.0)
    return h @ w3 + b3


def _reference_bf16(x, params):
    # Same precision recipe as the kernel: bf16 matmul inputs, f32 accumulation.
    w1, b1, w2, b2, w3, b3 = params
    bf = jnp.bfloat16
    h = jnp.maximum(jnp.dot(x.astype(bf), w1.astype(bf), preferred_element_type=jnp.float32) + b1, 0.0)
    h = jnp.maximum(jnp.dot(h.astype(bf), w2.astype(bf), preferred_element_type=jnp.float32) + b2, 0.0)
    return jnp.dot(h.astype(bf), w3.astype(bf), preferred_element_type=jnp.float32) + b3


if __name__ == "__main__":
    key = jax.random.PRNGKey(0)
    k_x, k_x2, k_p = jax.random.split(key, 3)

    # Small DQN-head shapes consistent with the module.
    batch, input_dim, hidden_dim, output_dim = 8, 8, 32, 4
    params = init_mlp_params(k_p, input_dim, hidden_dim, output_dim)
    padded_params, out_dim = prepare_params(params)  # hoisted out of the per-call path

    # Case 1: small, evenly tiled batch.
    x = jax.random.normal(k_x, (batch, input_dim), jnp.float32)
    out = mlp_forward(x, padded_params, out_dim)
    jax.block_until_ready(out)
    assert out.shape == (batch, output_dim)
    ref32 = _reference_f32(x, params)
    refbf = _reference_bf16(x, params)
    assert jnp.allclose(out, ref32, atol=1e-1, rtol=1e-1), float(jnp.max(jnp.abs(out - ref32)))
    assert jnp.allclose(out, refbf, atol=1e-3, rtol=1e-3), float(jnp.max(jnp.abs(out - refbf)))

    # Case 2: ragged batch (exercises grid = cdiv(B, tile_b) with a masked edge block
    # and a >=2-step "parallel" grid for megacore).
    batch2 = 20
    x2 = jax.random.normal(k_x2, (batch2, input_dim), jnp.float32)
    out2 = mlp_forward(x2, padded_params, out_dim)
    jax.block_until_ready(out2)
    assert out2.shape == (batch2, output_dim)
    ref32_2 = _reference_f32(x2, params)
    refbf_2 = _reference_bf16(x2, params)
    assert jnp.allclose(out2, ref32_2, atol=1e-1, rtol=1e-1), float(jnp.max(jnp.abs(out2 - ref32_2)))
    assert jnp.allclose(out2, refbf_2, atol=1e-3, rtol=1e-3), float(jnp.max(jnp.abs(out2 - refbf_2)))

    print("KERNEL_OK")
</pallas_src>

<mosaic_0001>
module attributes {stable_mosaic.version = 11 : i64} {
  func.func @_mlp_fused_kernel(%arg0: i32, %arg1: memref<8x8xf32, #tpu.memory_space<vmem>>, %arg2: memref<8x128xbf16, #tpu.memory_space<vmem>>, %arg3: memref<1x128xf32, #tpu.memory_space<vmem>>, %arg4: memref<128x128xbf16, #tpu.memory_space<vmem>>, %arg5: memref<1x128xf32, #tpu.memory_space<vmem>>, %arg6: memref<128x128xbf16, #tpu.memory_space<vmem>>, %arg7: memref<1x128xf32, #tpu.memory_space<vmem>>, %arg8: memref<8x128xf32, #tpu.memory_space<vmem>>) attributes {dimension_semantics = [#tpu.dimension_semantics<parallel>], iteration_bounds = array<i64: 1>, scalar_prefetch = 0 : i64, scratch_operands = 0 : i64, tpu.core_type = #tpu.core_type<tc>, window_params = [{transform_indices = @transform_0, window_bounds = array<i64: 8, 8>}, {pipeline_mode = #tpu.pipeline_mode<synchronous>, transform_indices = @transform_1, window_bounds = array<i64: 8, 128>}, {pipeline_mode = #tpu.pipeline_mode<synchronous>, transform_indices = @transform_2, window_bounds = array<i64: 1, 128>}, {pipeline_mode = #tpu.pipeline_mode<synchronous>, transform_indices = @transform_3, window_bounds = array<i64: 128, 128>}, {pipeline_mode = #tpu.pipeline_mode<synchronous>, transform_indices = @transform_4, window_bounds = array<i64: 1, 128>}, {pipeline_mode = #tpu.pipeline_mode<synchronous>, transform_indices = @transform_5, window_bounds = array<i64: 128, 128>}, {pipeline_mode = #tpu.pipeline_mode<synchronous>, transform_indices = @transform_6, window_bounds = array<i64: 1, 128>}, {transform_indices = @transform_7, window_bounds = array<i64: 8, 128>}]} {
    %c0 = arith.constant 0 : index
    %c0_0 = arith.constant 0 : index
    %0 = vector.load %arg1[%c0, %c0_0] : memref<8x8xf32, #tpu.memory_space<vmem>>, vector<8x8xf32>
    %1 = arith.truncf %0 : vector<8x8xf32> to vector<8x8xbf16>
    %c0_1 = arith.constant 0 : index
    %c0_2 = arith.constant 0 : index
    %2 = vector.load %arg2[%c0_1, %c0_2] : memref<8x128xbf16, #tpu.memory_space<vmem>>, vector<8x128xbf16>
    %cst = arith.constant dense<0.000000e+00> : vector<8x128xf32>
    %3 = tpu.matmul %1, %2, %cst {dimension_numbers = #tpu.dot_dimension_numbers<[1], [0], [0], [1], [0, 0, 1, 1], [], []>} : vector<8x8xbf16>, vector<8x128xbf16>, vector<8x128xf32> -> vector<8x128xf32>
    %c0_3 = arith.constant 0 : index
    %c0_4 = arith.constant 0 : index
    %4 = vector.load %arg3[%c0_3, %c0_4] : memref<1x128xf32, #tpu.memory_space<vmem>>, vector<1x128xf32>
    %5 = vector.broadcast %4 : vector<1x128xf32> to vector<8x128xf32>
    %6 = arith.addf %3, %5 : vector<8x128xf32>
    %cst_5 = arith.constant 0.000000e+00 : f32
    %7 = vector.broadcast %cst_5 : f32 to vector<8x128xf32>
    %8 = arith.maximumf %6, %7 : vector<8x128xf32>
    %9 = arith.truncf %8 : vector<8x128xf32> to vector<8x128xbf16>
    %c0_6 = arith.constant 0 : index
    %c0_7 = arith.constant 0 : index
    %10 = vector.load %arg4[%c0_6, %c0_7] : memref<128x128xbf16, #tpu.memory_space<vmem>>, vector<128x128xbf16>
    %cst_8 = arith.constant dense<0.000000e+00> : vector<8x128xf32>
    %11 = tpu.matmul %9, %10, %cst_8 {dimension_numbers = #tpu.dot_dimension_numbers<[1], [0], [0], [1], [0, 0, 1, 1], [], []>} : vector<8x128xbf16>, vector<128x128xbf16>, vector<8x128xf32> -> vector<8x128xf32>
    %c0_9 = arith.constant 0 : index
    %c0_10 = arith.constant 0 : index
    %12 = vector.load %arg5[%c0_9, %c0_10] : memref<1x128xf32, #tpu.memory_space<vmem>>, vector<1x128xf32>
    %13 = vector.broadcast %12 : vector<1x128xf32> to vector<8x128xf32>
    %14 = arith.addf %11, %13 : vector<8x128xf32>
    %cst_11 = arith.constant 0.000000e+00 : f32
    %15 = vector.broadcast %cst_11 : f32 to vector<8x128xf32>
    %16 = arith.maximumf %14, %15 : vector<8x128xf32>
    %17 = arith.truncf %16 : vector<8x128xf32> to vector<8x128xbf16>
    %c0_12 = arith.constant 0 : index
    %c0_13 = arith.constant 0 : index
    %18 = vector.load %arg6[%c0_12, %c0_13] : memref<128x128xbf16, #tpu.memory_space<vmem>>, vector<128x128xbf16>
    %cst_14 = arith.constant dense<0.000000e+00> : vector<8x128xf32>
    %19 = tpu.matmul %17, %18, %cst_14 {dimension_numbers = #tpu.dot_dimension_numbers<[1], [0], [0], [1], [0, 0, 1, 1], [], []>} : vector<8x128xbf16>, vector<128x128xbf16>, vector<8x128xf32> -> vector<8x128xf32>
    %c0_15 = arith.constant 0 : index
    %c0_16 = arith.constant 0 : index
    %20 = vector.load %arg7[%c0_15, %c0_16] : memref<1x128xf32, #tpu.memory_space<vmem>>, vector<1x128xf32>
    %21 = vector.broadcast %20 : vector<1x128xf32> to vector<8x128xf32>
    %22 = arith.addf %19, %21 : vector<8x128xf32>
    %c0_17 = arith.constant 0 : index
    %c0_18 = arith.constant 0 : index
    %23 = vector.load %arg8[%c0_17, %c0_18] : memref<8x128xf32, #tpu.memory_space<vmem>>, vector<8x128xf32>
    tpu.vector_store %arg8[%c0_17, %c0_18], %22 {strides = array<i32>} : memref<8x128xf32, #tpu.memory_space<vmem>>, vector<8x128xf32>,
    return
  }
  func.func @transform_0(%arg0: i32) -> (i32, i32) {
    %c0_i32 = arith.constant 0 : i32
    %c0_i32_0 = arith.constant 0 : i32
    return %arg0, %c0_i32 : i32, i32
  }
  func.func @transform_1(%arg0: i32) -> (i32, i32) {
    %c0_i32 = arith.constant 0 : i32
    %c0_i32_0 = arith.constant 0 : i32
    %c0_i32_1 = arith.constant 0 : i32
    return %c0_i32, %c0_i32_0 : i32, i32
  }
  func.func @transform_2(%arg0: i32) -> (i32, i32) {
    %c0_i32 = arith.constant 0 : i32
    %c0_i32_0 = arith.constant 0 : i32
    %c0_i32_1 = arith.constant 0 : i32
    return %c0_i32, %c0_i32_0 : i32, i32
  }
  func.func @transform_3(%arg0: i32) -> (i32, i32) {
    %c0_i32 = arith.constant 0 : i32
    %c0_i32_0 = arith.constant 0 : i32
    %c0_i32_1 = arith.constant 0 : i32
    return %c0_i32, %c0_i32_0 : i32, i32
  }
  func.func @transform_4(%arg0: i32) -> (i32, i32) {
    %c0_i32 = arith.constant 0 : i32
    %c0_i32_0 = arith.constant 0 : i32
    %c0_i32_1 = arith.constant 0 : i32
    return %c0_i32, %c0_i32_0 : i32, i32
  }
  func.func @transform_5(%arg0: i32) -> (i32, i32) {
    %c0_i32 = arith.constant 0 : i32
    %c0_i32_0 = arith.constant 0 : i32
    %c0_i32_1 = arith.constant 0 : i32
    return %c0_i32, %c0_i32_0 : i32, i32
  }
  func.func @transform_6(%arg0: i32) -> (i32, i32) {
    %c0_i32 = arith.constant 0 : i32
    %c0_i32_0 = arith.constant 0 : i32
    %c0_i32_1 = arith.constant 0 : i32
    return %c0_i32, %c0_i32_0 : i32, i32
  }
  func.func @transform_7(%arg0: i32) -> (i32, i32) {
    %c0_i32 = arith.constant 0 : i32
    %c0_i32_0 = arith.constant 0 : i32
    return %arg0, %c0_i32 : i32, i32
  }
}

</mosaic_0001>

<llo_original>
// kernel: tpu_custom_call.1
$region0: #{tpu_custom_call.1}
  #allocation0 [shape = 'u32[]', space=smem, size = 0x4, offset = 0x4, fixed_abs, tag = 'smem constant byte address 0x4 - core index']
  #allocation1 [shape = 'u32[72,128]{1,0:T(1,128)}', space=vmem, size = 0x9000, scoped, tag = 'internal scratch']
  %s0 = inlined_call_operand.hbm [shape: f32[8,8], index: 0, kind: input, shape index: {}]
  %s1 = inlined_call_operand.hbm [shape: bf16[8,128], index: 1, kind: input, shape index: {}]
  %s2 = inlined_call_operand.vmem [shape: f32[1,128], index: 2, kind: input, shape index: {}]
  %s3 = inlined_call_operand.hbm [shape: bf16[128,128], index: 3, kind: input, shape index: {}]
  %s4 = inlined_call_operand.vmem [shape: f32[1,128], index: 4, kind: input, shape index: {}]
  %s5 = inlined_call_operand.hbm [shape: bf16[128,128], index: 5, kind: input, shape index: {}]
  %s6 = inlined_call_operand.vmem [shape: f32[1,128], index: 6, kind: input, shape index: {}]
  %s7 = inlined_call_operand.hbm [shape: f32[8,128], index: 7, kind: output, shape index: {}]
  %s8 = sld [smem:[#allocation0]]
  $region54: #{tpu_custom_call.1} parent=0
    _
  %s10 = ssub.s32 1, %s8
  %s11 = scalar_select 0, %s10, %s8
  $region1: #{tpu_custom_call.1} parent=0
    #allocation2 [shape = 'u8[4096]{0}', space=vmem, size = 0x1000, scoped, tag = 'input window, operand 0, single buffered']
    #allocation3 [shape = 's32[1]{0}', space=sflag, size = 0x4, scoped, tag = 'scoped memory for tpu_custom_call.1']
    #allocation4 [shape = 's32[1]{0}', space=sflag, size = 0x4, scoped, tag = 'scoped memory for tpu_custom_call.1']
    #allocation5 [shape = 'u8[2048]{0}', space=vmem, size = 0x800, scoped, tag = 'input window, operand 1, single buffered']
    #allocation6 [shape = 's32[1]{0}', space=sflag, size = 0x4, scoped, tag = 'scoped memory for tpu_custom_call.1']
    #allocation7 [shape = 'u8[32768]{0}', space=vmem, size = 0x8000, scoped, tag = 'input window, operand 3, single buffered']
    #allocation8 [shape = 'u8[32768]{0}', space=vmem, size = 0x8000, scoped, tag = 'input window, operand 5, single buffered']
    #allocation9 [shape = 's32[1]{0}', space=sflag, size = 0x4, scoped, tag = 'scoped memory for tpu_custom_call.1']
    #allocation10 [shape = 'u8[4096]{0}', space=vmem, size = 0x1000, scoped, tag = 'output window, operand 0, single buffered']
    %12 = vsyncpa [#allocation3], 0
    %13 = vsyncpa [#allocation6], 0
    %14 = vsyncpa [#allocation9], 0
    %15 = vsyncpa [#allocation4], 0
    // Predicated region
    $region2: #{tpu_custom_call.1} parent=1 // pred_check
      _
    $region3: #{tpu_custom_call.1} parent=1 // pred_check_branch
      %17 = sbr.rel (0) target = $region5
    $region4: #{tpu_custom_call.1} parent=1 // pred_region
      %19 = vsyncadd [#allocation3], 0
      %s21 = sshll.u32 %s0, 4
      %s22 = int_to_ptr.hbm [resolvable:$true] %s21
      %s23 = sshll.u32 [#allocation2], 4
      %s24 = int_to_ptr.vmem [resolvable:$true] %s23
      %26 = dma.hbm_to_vmem [thread:$0]  %s22, 128, %s24, [#allocation3]
    $region5: #{tpu_custom_call.1} parent=1 // pred_fallthru
      _
    // Predicated region
    $region6: #{tpu_custom_call.1} parent=1 // pred_check
      _
    $region7: #{tpu_custom_call.1} parent=1 // pred_check_branch
      %28 = sbr.rel (0) target = $region9
    $region8: #{tpu_custom_call.1} parent=1 // pred_region
      %30 = vsyncadd [#allocation6], 0
      %s32 = sshll.u32 %s1, 4
      %s33 = int_to_ptr.hbm [resolvable:$true] %s32
      %s34 = sshll.u32 [#allocation5], 4
      %s35 = int_to_ptr.vmem [resolvable:$true] %s34
      %37 = dma.hbm_to_vmem [thread:$0]  %s33, 64, %s35, [#allocation6]
    $region9: #{tpu_custom_call.1} parent=1 // pred_fallthru
      _
    // Predicated region
    $region10: #{tpu_custom_call.1} parent=1 // pred_check
      _
    $region11: #{tpu_custom_call.1} parent=1 // pred_check_branch
      %39 = sbr.rel (0) target = $region13
    $region12: #{tpu_custom_call.1} parent=1 // pred_region
      _
    $region13: #{tpu_custom_call.1} parent=1 // pred_fallthru
      _
    // Predicated region
    $region14: #{tpu_custom_call.1} parent=1 // pred_check
      _
    $region15: #{tpu_custom_call.1} parent=1 // pred_check_branch
      %41 = sbr.rel (0) target = $region17
    $region16: #{tpu_custom_call.1} parent=1 // pred_region
      %43 = vsyncadd [#allocation6], 0
      %s44 = sshll.u32 %s3, 4
      %s45 = int_to_ptr.hbm [resolvable:$true] %s44
      %s46 = sshll.u32 [#allocation7], 4
      %s47 = int_to_ptr.vmem [resolvable:$true] %s46
      %52 = dma.hbm_to_vmem [thread:$0]  %s45, 1024, %s47, [#allocation6], 64, 64, 4
    $region17: #{tpu_custom_call.1} parent=1 // pred_fallthru
      _
    // Predicated region
    $region18: #{tpu_custom_call.1} parent=1 // pred_check
      _
    $region19: #{tpu_custom_call.1} parent=1 // pred_check_branch
      %54 = sbr.rel (0) target = $region21
    $region20: #{tpu_custom_call.1} parent=1 // pred_region
      _
    $region21: #{tpu_custom_call.1} parent=1 // pred_fallthru
      _
    // Predicated region
    $region22: #{tpu_custom_call.1} parent=1 // pred_check
      _
    $region23: #{tpu_custom_call.1} parent=1 // pred_check_branch
      %56 = sbr.rel (0) target = $region25
    $region24: #{tpu_custom_call.1} parent=1 // pred_region
      %58 = vsyncadd [#allocation9], 0
      %s59 = sshll.u32 %s5, 4
      %s60 = int_to_ptr.hbm [resolvable:$true] %s59
      %s61 = sshll.u32 [#allocation8], 4
      %s62 = int_to_ptr.vmem [resolvable:$true] %s61
      %67 = dma.hbm_to_vmem [thread:$0]  %s60, 1024, %s62, [#allocation9], 64, 64, 4
    $region25: #{tpu_custom_call.1} parent=1 // pred_fallthru
      _
    // Predicated region
    $region26: #{tpu_custom_call.1} parent=1 // pred_check
      _
    $region27: #{tpu_custom_call.1} parent=1 // pred_check_branch
      %69 = sbr.rel (0) target = $region29
    $region28: #{tpu_custom_call.1} parent=1 // pred_region
      _
    $region29: #{tpu_custom_call.1} parent=1 // pred_fallthru
      _
    // Predicated region
    $region30: #{tpu_custom_call.1} parent=1 // pred_check
      _
    $region31: #{tpu_custom_call.1} parent=1 // pred_check_branch
      %71 = sbr.rel (0) target = $region33
    $region32: #{tpu_custom_call.1} parent=1 // pred_region
      %73 = dma.done [#allocation3], 128
    $region33: #{tpu_custom_call.1} parent=1 // pred_fallthru
      _
    // Predicated region
    $region34: #{tpu_custom_call.1} parent=1 // pred_check
      _
    $region35: #{tpu_custom_call.1} parent=1 // pred_check_branch
      %75 = sbr.rel (0) target = $region37
    $region36: #{tpu_custom_call.1} parent=1 // pred_region
      %77 = dma.done [#allocation6], 64
    $region37: #{tpu_custom_call.1} parent=1 // pred_fallthru
      _
    // Predicated region
    $region38: #{tpu_custom_call.1} parent=1 // pred_check
      _
    $region39: #{tpu_custom_call.1} parent=1 // pred_check_branch
      %79 = sbr.rel (0) target = $region41
    $region40: #{tpu_custom_call.1} parent=1 // pred_region
      %81 = dma.done [#allocation6], 1024
    $region41: #{tpu_custom_call.1} parent=1 // pred_fallthru
      _
    // Predicated region
    $region42: #{tpu_custom_call.1} parent=1 // pred_check
      _
    $region43: #{tpu_custom_call.1} parent=1 // pred_check_branch
      %83 = sbr.rel (0) target = $region45
    $region44: #{tpu_custom_call.1} parent=1 // pred_region
      %85 = dma.done [#allocation9], 1024
    $region45: #{tpu_custom_call.1} parent=1 // pred_fallthru
      _
    %v87 = vld [vmem:[#allocation2] sm:$0xff]
    %v88 = vpack.c.bf16 %v87, %v87
    %v89 = vld [vmem:[#allocation5] sm:$0xf]
    %v90 = vld [vmem:[%s2] sm:$0x1]
    %v92 = vperm.slane %v90, 0
    %vm94 = vcmask 64512
    %v96 = vsel %vm94, %v88, 0
    %vm98 = vcmask 1043456
    %v100 = vsel %vm98, %v89, 0
    %102 = vmatpush.bf16.msra.mxu0 0
    %103 = vmatpush.bf16.msra.mxu0 0
    %104 = vmatpush.bf16.msra.mxu0 0
    %105 = vmatpush.bf16.msra.mxu0 0
    %106 = vmatpush.bf16.msra.mxu0 0
    %107 = vmatpush.bf16.msra.mxu0 0
    %108 = vmatpush.bf16.msra.mxu0 0
    %109 = vmatpush.bf16.msra.mxu0 %v100
    %110 = vmatmul.bf16.gmra.mxu0 %v96
    %v111 = vpop.f32.mrf.mxu0
    %v112 = vadd.f32 %v92, %v111
    %v113 = vpop.f32.mrf.mxu0
    %114 = vdwg.mxu0
    %v115 = vmax.f32 %v112, 0.0
    %v116 = vpack.c.bf16 %v115, %v115
    %v117 = vld [vmem:[#allocation7] sm:$0xf]
    %v118 = vld [vmem:[#allocation7 + $0x4] sm:$0xf]
    %v119 = vld [vmem:[#allocation7 + $0x8] sm:$0xf]
    %v120 = vld [vmem:[#allocation7 + $0xc] sm:$0xf]
    %v121 = vld [vmem:[#allocation7 + $0x10] sm:$0xf]
    %v122 = vld [vmem:[#allocation7 + $0x14] sm:$0xf]
    %v123 = vld [vmem:[#allocation7 + $0x18] sm:$0xf]
    %v124 = vld [vmem:[#allocation7 + $0x1c] sm:$0xf]
    %v125 = vld [vmem:[#allocation7 + $0x20] sm:$0xf]
    %v126 = vld [vmem:[#allocation7 + $0x24] sm:$0xf]
    %v127 = vld [vmem:[#allocation7 + $0x28] sm:$0xf]
    %v128 = vld [vmem:[#allocation7 + $0x2c] sm:$0xf]
    %v129 = vld [vmem:[#allocation7 + $0x30] sm:$0xf]
    %v130 = vld [vmem:[#allocation7 + $0x34] sm:$0xf]
    %v131 = vld [vmem:[#allocation7 + $0x38] sm:$0xf]
    %v132 = vld [vmem:[#allocation7 + $0x3c] sm:$0xf]
    %v133 = vld [vmem:[%s4] sm:$0x1]
    %v135 = vperm.slane %v133, 0
    %v153 = vunpack.c.l.b16 %v117
    %v154 = vunpack.c.l.b16 %v118
    %v155 = vunpack.c.l.b16 %v119
    %v156 = vunpack.c.l.b16 %v120
    %v157 = vunpack.c.l.b16 %v121
    %v158 = vunpack.c.l.b16 %v122
    %v159 = vunpack.c.l.b16 %v123
    %v160 = vunpack.c.l.b16 %v124
    %v161 = vunpack.c.l.b16 %v125
    %v162 = vunpack.c.l.b16 %v126
    %v163 = vunpack.c.l.b16 %v127
    %v164 = vunpack.c.l.b16 %v128
    %v165 = vunpack.c.l.b16 %v129
    %v166 = vunpack.c.l.b16 %v130
    %v167 = vunpack.c.l.b16 %v131
    %v168 = vunpack.c.l.b16 %v132
    %v169 = vpack.c.b16 %v154, %v153
    %v170 = vpack.c.b16 %v156, %v155
    %v171 = vpack.c.b16 %v158, %v157
    %v172 = vpack.c.b16 %v160, %v159
    %v173 = vpack.c.b16 %v162, %v161
    %v174 = vpack.c.b16 %v164, %v163
    %v175 = vpack.c.b16 %v166, %v165
    %v176 = vpack.c.b16 %v168, %v167
    %185 = vmatpush.bf16.msra.mxu0 %v176
    %186 = vmatpush.bf16.msra.mxu0 %v175
    %187 = vmatpush.bf16.msra.mxu0 %v174
    %188 = vmatpush.bf16.msra.mxu0 %v173
    %189 = vmatpush.bf16.msra.mxu0 %v172
    %190 = vmatpush.bf16.msra.mxu0 %v171
    %191 = vmatpush.bf16.msra.mxu0 %v170
    %192 = vmatpush.bf16.msra.mxu0 %v169
    %193 = vmatmul.bf16.gmra.mxu0 %v116
    %v194 = vpop.f32.mrf.mxu0
    %v195 = vadd.f32 %v135, %v194
    %v196 = vpop.f32.mrf.mxu0
    %197 = vdwg.mxu0
    %v198 = vmax.f32 %v195, 0.0
    %v199 = vpack.c.bf16 %v198, %v198
    %v200 = vld [vmem:[#allocation8] sm:$0xf]
    %v201 = vld [vmem:[#allocation8 + $0x4] sm:$0xf]
    %v202 = vld [vmem:[#allocation8 + $0x8] sm:$0xf]
    %v203 = vld [vmem:[#allocation8 + $0xc] sm:$0xf]
    %v204 = vld [vmem:[#allocation8 + $0x10] sm:$0xf]
    %v205 = vld [vmem:[#allocation8 + $0x14] sm:$0xf]
    %v206 = vld [vmem:[#allocation8 + $0x18] sm:$0xf]
    %v207 = vld [vmem:[#allocation8 + $0x1c] sm:$0xf]
    %v208 = vld [vmem:[#allocation8 + $0x20] sm:$0xf]
    %v209 = vld [vmem:[#allocation8 + $0x24] sm:$0xf]
    %v210 = vld [vmem:[#allocation8 + $0x28] sm:$0xf]
    %v211 = vld [vmem:[#allocation8 + $0x2c] sm:$0xf]
    %v212 = vld [vmem:[#allocation8 + $0x30] sm:$0xf]
    %v213 = vld [vmem:[#allocation8 + $0x34] sm:$0xf]
    %v214 = vld [vmem:[#allocation8 + $0x38] sm:$0xf]
    %v215 = vld [vmem:[#allocation8 + $0x3c] sm:$0xf]
    %v216 = vld [vmem:[%s6] sm:$0x1]
    %v218 = vperm.slane %v216, 0
    %v236 = vunpack.c.l.b16 %v200
    %v237 = vunpack.c.l.b16 %v201
    %v238 = vunpack.c.l.b16 %v202
    %v239 = vunpack.c.l.b16 %v203
    %v240 = vunpack.c.l.b16 %v204
    %v241 = vunpack.c.l.b16 %v205
    %v242 = vunpack.c.l.b16 %v206
    %v243 = vunpack.c.l.b16 %v207
    %v244 = vunpack.c.l.b16 %v208
    %v245 = vunpack.c.l.b16 %v209
    %v246 = vunpack.c.l.b16 %v210
    %v247 = vunpack.c.l.b16 %v211
    %v248 = vunpack.c.l.b16 %v212
    %v249 = vunpack.c.l.b16 %v213
    %v250 = vunpack.c.l.b16 %v214
    %v251 = vunpack.c.l.b16 %v215
    %v252 = vpack.c.b16 %v237, %v236
    %v253 = vpack.c.b16 %v239, %v238
    %v254 = vpack.c.b16 %v241, %v240
    %v255 = vpack.c.b16 %v243, %v242
    %v256 = vpack.c.b16 %v245, %v244
    %v257 = vpack.c.b16 %v247, %v246
    %v258 = vpack.c.b16 %v249, %v248
    %v259 = vpack.c.b16 %v251, %v250
    %268 = vmatpush.bf16.msra.mxu0 %v259
    %269 = vmatpush.bf16.msra.mxu0 %v258
    %270 = vmatpush.bf16.msra.mxu0 %v257
    %271 = vmatpush.bf16.msra.mxu0 %v256
    %272 = vmatpush.bf16.msra.mxu0 %v255
    %273 = vmatpush.bf16.msra.mxu0 %v254
    %274 = vmatpush.bf16.msra.mxu0 %v253
    %275 = vmatpush.bf16.msra.mxu0 %v252
    %276 = vmatmul.bf16.gmra.mxu0 %v199
    %v277 = vpop.f32.mrf.mxu0
    %v278 = vadd.f32 %v218, %v277
    %v279 = vpop.f32.mrf.mxu0
    %280 = vdwg.mxu0
    %281 = vst [vmem:[#allocation10] sm:$0xff] %v278
    // Predicated region
    $region46: #{tpu_custom_call.1} parent=1 // pred_check
      _
    $region47: #{tpu_custom_call.1} parent=1 // pred_check_branch
      %283 = sbr.rel (0) target = $region49
    $region48: #{tpu_custom_call.1} parent=1 // pred_region
      %285 = vsyncadd [#allocation4], 0
      %s287 = sshll.u32 [#allocation10], 4
      %s288 = int_to_ptr.vmem [resolvable:$true] %s287
      %s289 = sshll.u32 %s7, 4
      %s290 = int_to_ptr.hbm [resolvable:$true] %s289
      %292 = dma.vmem_to_hbm [thread:$0]  %s288, 128, %s290, [#allocation4]
    $region49: #{tpu_custom_call.1} parent=1 // pred_fallthru
      _
    // Predicated region
    $region50: #{tpu_custom_call.1} parent=1 // pred_check
      _
    $region51: #{tpu_custom_call.1} parent=1 // pred_check_branch
      %294 = sbr.rel (0) target = $region53
    $region52: #{tpu_custom_call.1} parent=1 // pred_region
      %296 = dma.done [#allocation4], 128
    $region53: #{tpu_custom_call.1} parent=1 // pred_fallthru
      _
    %297 = vsyncpa [#allocation3], 1
    %298 = vsyncpa [#allocation6], 1
    %299 = vsyncpa [#allocation9], 1
    %300 = vsyncpa [#allocation4], 1

</llo_original>
